<compile_context>
chip_gen: v5e
topology: v5e:2x2
jax: 0.10.0
libtpu: 0.0.40
codegen_flags: <defaults>
</compile_context>

<pallas_src>
import functools

import jax
import jax.numpy as jnp
from jax.experimental import pallas as pl
from jax.experimental.pallas import tpu as pltpu


def _patch_embed_kernel(x_ref, w_ref, b_ref, o_ref):
    # x_ref: (TM, K_pad)    bf16 patch-matrix tile (pipelined along M)
    # w_ref: (K_pad, E_pad) bf16 projection weight (resident, single-buffered)
    # b_ref: (1, E_pad)     f32 bias (resident, single-buffered)
    # o_ref: (TM, E_pad)    output tile
    acc = jnp.dot(x_ref[...], w_ref[...], preferred_element_type=jnp.float32)
    o_ref[...] = (acc + b_ref[...]).astype(o_ref.dtype)


def _round_up(x, m):
    return ((x + m - 1) // m) * m


@functools.partial(
    jax.jit,
    static_argnames=("patch_size", "tile_m", "out_dtype", "vmem_limit_bytes"),
)
def patch_embedding(x, weight, bias, patch_size, *, tile_m=1024, out_dtype=None,
                    vmem_limit_bytes=48 * 1024 * 1024):
    """x: (B, C, H, W) NCHW; weight: (E, C, P, P) Conv2d layout; bias: (E,).

    Returns (B, num_patches, E).  out_dtype=None keeps x.dtype (faithful to the
    PyTorch module); out_dtype=jnp.bfloat16 halves output HBM/VMEM traffic.
    NOTE: MXU inputs are bf16 with f32 accumulation (deviates from f32 Conv2d
    at the ~1e-3 relative level).
    """
    B, C, H, W = x.shape
    E = weight.shape[0]
    P = patch_size
    assert H % P == 0 and W % P == 0, "image size must be divisible by patch size"
    nh, nw = H // P, W // P
    num_patches = nh * nw

    out_dtype = x.dtype if out_dtype is None else out_dtype
    out_itemsize = jnp.dtype(out_dtype).itemsize

    # --- patchify glue: cast to bf16 first so the transpose pass moves half
    # the bytes; reshape/transpose fuse with the cast under jit. ---
    xb = x.astype(jnp.bfloat16)
    xp = xb.reshape(B, C, nh, P, nw, P)
    xp = jnp.transpose(xp, (0, 2, 4, 1, 3, 5)).reshape(B * num_patches, C * P * P)

    M, K = xp.shape
    # Conv2d weight (E, C, P, P) -> matmul weight (K, E), bf16 for the MXU.
    w_mat = weight.reshape(E, K).T.astype(jnp.bfloat16)
    b_mat = bias.reshape(1, E).astype(jnp.float32)

    # Lane-dense zero padding on the minor dims. jnp.pad is a no-op when
    # already aligned and avoids a zeros+scatter materialization.
    K_pad = _round_up(K, 128)
    E_pad = _round_up(E, 128)
    if E_pad > 128 and E_pad % 256 != 0:
        E_pad = _round_up(E_pad, 256)   # fill the 256-wide MXU N dim (v6e/v7x)

    xp_p = jnp.pad(xp, ((0, 0), (0, K_pad - K))) if K_pad != K else xp
    w_p = jnp.pad(w_mat, ((0, K_pad - K), (0, E_pad - E)))
    b_p = jnp.pad(b_mat, ((0, 0), (0, E_pad - E)))

    # --- M tiling: no M padding; pick the largest TM that fits the VMEM budget.
    TM = tile_m if M >= tile_m else _round_up(M, 8)

    def footprint(tm):
        return (2 * tm * K_pad * 2               # double-buffered x tiles (bf16)
                + 2 * tm * E_pad * out_itemsize  # double-buffered output tiles
                + 1 * K_pad * E_pad * 2          # weight, single-buffered
                + 1 * E_pad * 4)                 # bias, single-buffered

    budget = vmem_limit_bytes - (4 << 20)        # headroom for compiler scratch
    while footprint(TM) > budget and TM > 256:
        TM //= 2
    assert footprint(TM) <= budget, "projection weight alone exceeds the VMEM budget"

    grid_m = pl.cdiv(M, TM)

    cost = pl.CostEstimate(
        flops=2 * M * K_pad * E_pad,
        bytes_accessed=(M * K_pad * 2 + K_pad * E_pad * 2 + E_pad * 4
                        + M * E_pad * out_itemsize),
        transcendentals=0,
    )

    out = pl.pallas_call(
        _patch_embed_kernel,
        out_shape=jax.ShapeDtypeStruct((M, E_pad), out_dtype),
        grid_spec=pltpu.PrefetchScalarGridSpec(
            num_scalar_prefetch=0,
            grid=(grid_m,),
            in_specs=[
                # Patch-matrix tiles: default double-buffered pipeline along M.
                pl.BlockSpec((TM, K_pad), lambda i: (i, 0)),
                # Weight / bias: constant index_map -> DMA'd once and resident;
                # single-buffered to halve their VMEM footprint.
                pl.BlockSpec((K_pad, E_pad), lambda i: (0, 0),
                             pipeline_mode=pl.Buffered(1)),
                pl.BlockSpec((1, E_pad), lambda i: (0, 0),
                             pipeline_mode=pl.Buffered(1)),
            ],
            out_specs=pl.BlockSpec((TM, E_pad), lambda i: (i, 0)),
        ),
        compiler_params=pltpu.CompilerParams(
            # Independent M tiles -> shard across the 2 TCs on v7x.
            # TODO(synk): switch to pltpu.CORE_PARALLEL if profiling shows no 2-TC split.
            dimension_semantics=("parallel",),
            vmem_limit_bytes=vmem_limit_bytes,
        ),
        cost_estimate=cost,
    )(xp_p, w_p, b_p)

    # Strip the E padding (M was never padded), restore (B, num_patches, E).
    out = out[:, :E] if E_pad != E else out
    return out.reshape(B, num_patches, E)


if __name__ == "__main__":
    # Small shapes consistent with the module: B=2, C=4, H=W=16, patch=8, embed=32
    B, C, H, W = 2, 4, 16, 16
    P, E = 8, 32

    key = jax.random.PRNGKey(0)
    kx, kw, kb = jax.random.split(key, 3)
    x = jax.random.normal(kx, (B, C, H, W), dtype=jnp.float32)
    # Deterministic synthetic Conv2d params: weight (E, C, P, P), bias (E,)
    weight = jax.random.normal(kw, (E, C, P, P), dtype=jnp.float32) * 0.02
    bias = jax.random.normal(kb, (E,), dtype=jnp.float32) * 0.02

    out = jax.block_until_ready(patch_embedding(x, weight, bias, P))
    assert out.shape == (B, (H // P) * (W // P), E)
    assert out.dtype == x.dtype

    # References with identical conv-as-matmul semantics.
    xp = x.reshape(B, C, H // P, P, W // P, P)
    xp = jnp.transpose(xp, (0, 2, 4, 1, 3, 5)).reshape(B * (H // P) * (W // P), C * P * P)
    w_mat = weight.reshape(E, -1).T

    # Tight check vs a bf16-input / f32-accumulate reference (matches kernel precision).
    ref_bf16 = (xp.astype(jnp.bfloat16).astype(jnp.float32)
                @ w_mat.astype(jnp.bfloat16).astype(jnp.float32) + bias).reshape(B, -1, E)
    assert jnp.allclose(out, ref_bf16, atol=1e-4, rtol=1e-4)

    # Loose check vs the pure-f32 Conv2d semantics (bf16 rounding tolerance).
    ref_f32 = (xp @ w_mat + bias).reshape(B, -1, E)
    assert jnp.allclose(out, ref_f32, atol=3e-2, rtol=3e-2)

    # bf16-output fast path (recommended when patch-embed is bandwidth-bound).
    out_bf16 = jax.block_until_ready(
        patch_embedding(x, weight, bias, P, out_dtype=jnp.bfloat16))
    assert out_bf16.dtype == jnp.bfloat16
    assert jnp.allclose(out_bf16.astype(jnp.float32), ref_f32, atol=5e-2, rtol=5e-2)

    print("KERNEL_OK")
</pallas_src>

<mosaic_0001>
module attributes {stable_mosaic.version = 11 : i64} {
  func.func @_patch_embed_kernel(%arg0: i32, %arg1: memref<8x256xbf16, #tpu.memory_space<vmem>>, %arg2: memref<256x128xbf16, #tpu.memory_space<vmem>>, %arg3: memref<1x128xf32, #tpu.memory_space<vmem>>, %arg4: memref<8x128xf32, #tpu.memory_space<vmem>>) attributes {dimension_semantics = [#tpu.dimension_semantics<parallel>], iteration_bounds = array<i64: 1>, scalar_prefetch = 0 : i64, scratch_operands = 0 : i64, tpu.core_type = #tpu.core_type<tc>, window_params = [{transform_indices = @transform_0, window_bounds = array<i64: 8, 256>}, {pipeline_mode = #tpu.pipeline_mode<synchronous>, transform_indices = @transform_1, window_bounds = array<i64: 256, 128>}, {pipeline_mode = #tpu.pipeline_mode<synchronous>, transform_indices = @transform_2, window_bounds = array<i64: 1, 128>}, {transform_indices = @transform_3, window_bounds = array<i64: 8, 128>}]} {
    %c0 = arith.constant 0 : index
    %c0_0 = arith.constant 0 : index
    %0 = vector.load %arg1[%c0, %c0_0] : memref<8x256xbf16, #tpu.memory_space<vmem>>, vector<8x256xbf16>
    %c0_1 = arith.constant 0 : index
    %c0_2 = arith.constant 0 : index
    %1 = vector.load %arg2[%c0_1, %c0_2] : memref<256x128xbf16, #tpu.memory_space<vmem>>, vector<256x128xbf16>
    %cst = arith.constant dense<0.000000e+00> : vector<8x128xf32>
    %2 = tpu.matmul %0, %1, %cst {dimension_numbers = #tpu.dot_dimension_numbers<[1], [0], [0], [1], [0, 0, 1, 1], [], []>} : vector<8x256xbf16>, vector<256x128xbf16>, vector<8x128xf32> -> vector<8x128xf32>
    %c0_3 = arith.constant 0 : index
    %c0_4 = arith.constant 0 : index
    %3 = vector.load %arg3[%c0_3, %c0_4] : memref<1x128xf32, #tpu.memory_space<vmem>>, vector<1x128xf32>
    %4 = vector.broadcast %3 : vector<1x128xf32> to vector<8x128xf32>
    %5 = arith.addf %2, %4 : vector<8x128xf32>
    %c0_5 = arith.constant 0 : index
    %c0_6 = arith.constant 0 : index
    %6 = vector.load %arg4[%c0_5, %c0_6] : memref<8x128xf32, #tpu.memory_space<vmem>>, vector<8x128xf32>
    tpu.vector_store %arg4[%c0_5, %c0_6], %5 {strides = array<i32>} : memref<8x128xf32, #tpu.memory_space<vmem>>, vector<8x128xf32>,
    return
  }
  func.func @transform_0(%arg0: i32) -> (i32, i32) {
    %c0_i32 = arith.constant 0 : i32
    %c0_i32_0 = arith.constant 0 : i32
    return %arg0, %c0_i32 : i32, i32
  }
  func.func @transform_1(%arg0: i32) -> (i32, i32) {
    %c0_i32 = arith.constant 0 : i32
    %c0_i32_0 = arith.constant 0 : i32
    %c0_i32_1 = arith.constant 0 : i32
    return %c0_i32, %c0_i32_0 : i32, i32
  }
  func.func @transform_2(%arg0: i32) -> (i32, i32) {
    %c0_i32 = arith.constant 0 : i32
    %c0_i32_0 = arith.constant 0 : i32
    %c0_i32_1 = arith.constant 0 : i32
    return %c0_i32, %c0_i32_0 : i32, i32
  }
  func.func @transform_3(%arg0: i32) -> (i32, i32) {
    %c0_i32 = arith.constant 0 : i32
    %c0_i32_0 = arith.constant 0 : i32
    return %arg0, %c0_i32 : i32, i32
  }
}

</mosaic_0001>

<llo_original>
// kernel: patch_embedding.1
$region0: #{patch_embedding.1}
  #allocation0 [shape = 'u32[]', space=smem, size = 0x4, offset = 0x4, fixed_abs, tag = 'smem constant byte address 0x4 - core index']
  #allocation1 [shape = 'u32[72,128]{1,0:T(1,128)}', space=vmem, size = 0x9000, scoped, tag = 'internal scratch']
  %s0 = inlined_call_operand.vmem [shape: bf16[8,256], index: 0, kind: input, shape index: {}]
  %s1 = inlined_call_operand.vmem [shape: bf16[256,128], index: 1, kind: input, shape index: {}]
  %s2 = inlined_call_operand.vmem [shape: f32[1,128], index: 2, kind: input, shape index: {}]
  %s3 = inlined_call_operand.hbm [shape: f32[8,128], index: 3, kind: output, shape index: {}]
  %s4 = sld [smem:[#allocation0]]
  $region22: #{patch_embedding.1} parent=0
    _
  %s6 = ssub.s32 1, %s4
  %s7 = scalar_select 0, %s6, %s4
  $region1: #{patch_embedding.1} parent=0
    #allocation2 [shape = 'u8[4096]{0}', space=vmem, size = 0x1000, scoped, tag = 'output window, operand 0, single buffered']
    #allocation3 [shape = 's32[1]{0}', space=sflag, size = 0x4, scoped, tag = 'scoped memory for patch_embedding.1']
    %8 = vsyncpa [#allocation3], 0
    // Predicated region
    $region2: #{patch_embedding.1} parent=1 // pred_check
      _
    $region3: #{patch_embedding.1} parent=1 // pred_check_branch
      %10 = sbr.rel (0) target = $region5
    $region4: #{patch_embedding.1} parent=1 // pred_region
      _
    $region5: #{patch_embedding.1} parent=1 // pred_fallthru
      _
    // Predicated region
    $region6: #{patch_embedding.1} parent=1 // pred_check
      _
    $region7: #{patch_embedding.1} parent=1 // pred_check_branch
      %12 = sbr.rel (0) target = $region9
    $region8: #{patch_embedding.1} parent=1 // pred_region
      _
    $region9: #{patch_embedding.1} parent=1 // pred_fallthru
      _
    // Predicated region
    $region10: #{patch_embedding.1} parent=1 // pred_check
      _
    $region11: #{patch_embedding.1} parent=1 // pred_check_branch
      %14 = sbr.rel (0) target = $region13
    $region12: #{patch_embedding.1} parent=1 // pred_region
      _
    $region13: #{patch_embedding.1} parent=1 // pred_fallthru
      _
    %v15 = vld [vmem:[%s0] sm:$0xff]
    %v16 = vld [vmem:[%s1] sm:$0xf]
    %v17 = vld [vmem:[%s1 + $0x4] sm:$0xf]
    %v18 = vld [vmem:[%s1 + $0x8] sm:$0xf]
    %v19 = vld [vmem:[%s1 + $0xc] sm:$0xf]
    %v20 = vld [vmem:[%s1 + $0x10] sm:$0xf]
    %v21 = vld [vmem:[%s1 + $0x14] sm:$0xf]
    %v22 = vld [vmem:[%s1 + $0x18] sm:$0xf]
    %v23 = vld [vmem:[%s1 + $0x1c] sm:$0xf]
    %v24 = vld [vmem:[%s1 + $0x20] sm:$0xf]
    %v25 = vld [vmem:[%s1 + $0x24] sm:$0xf]
    %v26 = vld [vmem:[%s1 + $0x28] sm:$0xf]
    %v27 = vld [vmem:[%s1 + $0x2c] sm:$0xf]
    %v28 = vld [vmem:[%s1 + $0x30] sm:$0xf]
    %v29 = vld [vmem:[%s1 + $0x34] sm:$0xf]
    %v30 = vld [vmem:[%s1 + $0x38] sm:$0xf]
    %v31 = vld [vmem:[%s1 + $0x3c] sm:$0xf]
    %v32 = vld [vmem:[%s1 + $0x40] sm:$0xf]
    %v33 = vld [vmem:[%s1 + $0x44] sm:$0xf]
    %v34 = vld [vmem:[%s1 + $0x48] sm:$0xf]
    %v35 = vld [vmem:[%s1 + $0x4c] sm:$0xf]
    %v36 = vld [vmem:[%s1 + $0x50] sm:$0xf]
    %v37 = vld [vmem:[%s1 + $0x54] sm:$0xf]
    %v38 = vld [vmem:[%s1 + $0x58] sm:$0xf]
    %v39 = vld [vmem:[%s1 + $0x5c] sm:$0xf]
    %v40 = vld [vmem:[%s1 + $0x60] sm:$0xf]
    %v41 = vld [vmem:[%s1 + $0x64] sm:$0xf]
    %v42 = vld [vmem:[%s1 + $0x68] sm:$0xf]
    %v43 = vld [vmem:[%s1 + $0x6c] sm:$0xf]
    %v44 = vld [vmem:[%s1 + $0x70] sm:$0xf]
    %v45 = vld [vmem:[%s1 + $0x74] sm:$0xf]
    %v46 = vld [vmem:[%s1 + $0x78] sm:$0xf]
    %v47 = vld [vmem:[%s1 + $0x7c] sm:$0xf]
    %v48 = vld [vmem:[%s2] sm:$0x1]
    %v50 = vperm.slane %v48, 0
    %v53 = vunpack.c.l.b16 %v15
    %v54 = vunpack.c.h.b16 %v15
    %v55 = vpack.c.b16 %v53, %v53
    %v56 = vpack.c.b16 %v54, %v54
    %v91 = vunpack.c.l.b16 %v16
    %v92 = vunpack.c.l.b16 %v17
    %v93 = vunpack.c.l.b16 %v18
    %v94 = vunpack.c.l.b16 %v19
    %v95 = vunpack.c.l.b16 %v20
    %v96 = vunpack.c.l.b16 %v21
    %v97 = vunpack.c.l.b16 %v22
    %v98 = vunpack.c.l.b16 %v23
    %v99 = vunpack.c.l.b16 %v24
    %v100 = vunpack.c.l.b16 %v25
    %v101 = vunpack.c.l.b16 %v26
    %v102 = vunpack.c.l.b16 %v27
    %v103 = vunpack.c.l.b16 %v28
    %v104 = vunpack.c.l.b16 %v29
    %v105 = vunpack.c.l.b16 %v30
    %v106 = vunpack.c.l.b16 %v31
    %v107 = vunpack.c.l.b16 %v32
    %v108 = vunpack.c.l.b16 %v33
    %v109 = vunpack.c.l.b16 %v34
    %v110 = vunpack.c.l.b16 %v35
    %v111 = vunpack.c.l.b16 %v36
    %v112 = vunpack.c.l.b16 %v37
    %v113 = vunpack.c.l.b16 %v38
    %v114 = vunpack.c.l.b16 %v39
    %v115 = vunpack.c.l.b16 %v40
    %v116 = vunpack.c.l.b16 %v41
    %v117 = vunpack.c.l.b16 %v42
    %v118 = vunpack.c.l.b16 %v43
    %v119 = vunpack.c.l.b16 %v44
    %v120 = vunpack.c.l.b16 %v45
    %v121 = vunpack.c.l.b16 %v46
    %v122 = vunpack.c.l.b16 %v47
    %v123 = vpack.c.b16 %v92, %v91
    %v124 = vpack.c.b16 %v94, %v93
    %v125 = vpack.c.b16 %v96, %v95
    %v126 = vpack.c.b16 %v98, %v97
    %v127 = vpack.c.b16 %v100, %v99
    %v128 = vpack.c.b16 %v102, %v101
    %v129 = vpack.c.b16 %v104, %v103
    %v130 = vpack.c.b16 %v106, %v105
    %v131 = vpack.c.b16 %v108, %v107
    %v132 = vpack.c.b16 %v110, %v109
    %v133 = vpack.c.b16 %v112, %v111
    %v134 = vpack.c.b16 %v114, %v113
    %v135 = vpack.c.b16 %v116, %v115
    %v136 = vpack.c.b16 %v118, %v117
    %v137 = vpack.c.b16 %v120, %v119
    %v138 = vpack.c.b16 %v122, %v121
    %155 = vmatpush.bf16.msra.mxu0 %v130
    %156 = vmatpush.bf16.msra.mxu0 %v129
    %157 = vmatpush.bf16.msra.mxu0 %v128
    %158 = vmatpush.bf16.msra.mxu0 %v127
    %159 = vmatpush.bf16.msra.mxu0 %v126
    %160 = vmatpush.bf16.msra.mxu0 %v125
    %161 = vmatpush.bf16.msra.mxu0 %v124
    %162 = vmatpush.bf16.msra.mxu0 %v123
    %163 = vmatmul.bf16.gmra.mxu0 %v55
    %v164 = vpop.f32.mrf.mxu0
    %v165 = vadd.f32 %v50, %v164
    %v166 = vpop.f32.mrf.mxu0
    %167 = vdwg.mxu0
    %168 = vmatpush.bf16.msra.mxu0 %v138
    %169 = vmatpush.bf16.msra.mxu0 %v137
    %170 = vmatpush.bf16.msra.mxu0 %v136
    %171 = vmatpush.bf16.msra.mxu0 %v135
    %172 = vmatpush.bf16.msra.mxu0 %v134
    %173 = vmatpush.bf16.msra.mxu0 %v133
    %174 = vmatpush.bf16.msra.mxu0 %v132
    %175 = vmatpush.bf16.msra.mxu0 %v131
    %176 = vmatmul.bf16.gmra.mxu0 %v56
    %v177 = vpop.f32.mrf.mxu0
    %v178 = vadd.f32 %v165, %v177
    %v179 = vpop.f32.mrf.mxu0
    %180 = vdwg.mxu0
    %181 = vst [vmem:[#allocation2] sm:$0xff] %v178
    // Predicated region
    $region14: #{patch_embedding.1} parent=1 // pred_check
      _
    $region15: #{patch_embedding.1} parent=1 // pred_check_branch
      %183 = sbr.rel (0) target = $region17
    $region16: #{patch_embedding.1} parent=1 // pred_region
      %185 = vsyncadd [#allocation3], 0
      %s187 = sshll.u32 [#allocation2], 4
      %s188 = int_to_ptr.vmem [resolvable:$true] %s187
      %s189 = sshll.u32 %s3, 4
      %s190 = int_to_ptr.hbm [resolvable:$true] %s189
      %192 = dma.vmem_to_hbm [thread:$0]  %s188, 128, %s190, [#allocation3]
    $region17: #{patch_embedding.1} parent=1 // pred_fallthru
      _
    // Predicated region
    $region18: #{patch_embedding.1} parent=1 // pred_check
      _
    $region19: #{patch_embedding.1} parent=1 // pred_check_branch
      %194 = sbr.rel (0) target = $region21
    $region20: #{patch_embedding.1} parent=1 // pred_region
      %196 = dma.done [#allocation3], 128
    $region21: #{patch_embedding.1} parent=1 // pred_fallthru
      _
    %197 = vsyncpa [#allocation3], 1

</llo_original>
